<compile_context>
chip_gen: v7x
topology: tpu7x:2x2x1
jax: 0.10.0
libtpu: 0.0.40
codegen_flags: <defaults>
</compile_context>

<pallas_src>
import jax
import jax.numpy as jnp
from jax.experimental import pallas as pl
from jax.experimental.pallas import tpu as pltpu


def _make_kernel(L, Lp, Cin, Cout, use_align):
    def body(xp_ref, w1_ref, wa_ref, b_ref, wd_ref, wu_ref, o_ref, res_scr):
        # Shifted activation windows (bf16) for the k=3, pad=1 conv.
        x0 = xp_ref[0, pl.ds(0, L), :]
        x1 = xp_ref[0, pl.ds(1, L), :]          # center window == unpadded input
        x2 = xp_ref[0, pl.ds(2, L), :]

        # conv1 (+folded BN1): three accumulated K=Cin matmuls, f32 accumulation.
        acc = jnp.dot(x0, w1_ref[0], preferred_element_type=jnp.float32)
        acc = acc + jnp.dot(x1, w1_ref[1], preferred_element_type=jnp.float32)
        acc = acc + jnp.dot(x2, w1_ref[2], preferred_element_type=jnp.float32)
        out = jnp.maximum(acc + b_ref[pl.ds(0, 1), :], 0.0)        # (L, Cout) f32

        # Shortcut: aligned 1x1 conv (+folded BNa) as a separate MXU push, or identity.
        if use_align:
            sc = (jnp.dot(x1, wa_ref[...], preferred_element_type=jnp.float32)
                  + b_ref[pl.ds(1, 1), :])
        else:
            sc = x1.astype(jnp.float32)

        # Squeeze-excite: global mean -> conv_down -> ReLU -> conv_up -> sigmoid.
        pooled = jnp.mean(out, axis=0, keepdims=True)               # (1, Cout)
        down = jnp.maximum(
            jnp.dot(pooled.astype(jnp.bfloat16), wd_ref[...],
                    preferred_element_type=jnp.float32), 0.0)       # (1, Cd)
        up = jax.nn.sigmoid(
            jnp.dot(down.astype(jnp.bfloat16), wu_ref[...],
                    preferred_element_type=jnp.float32))            # (1, Cout)

        # Scale + residual + ReLU (all f32).
        res = jnp.maximum(out * up + sc, 0.0)                       # (L, Cout)

        # MaxPool1d(3, stride=3): VMEM scratch round-trip, three stride-3 sublane
        # reads, one vectorized max, single output store.
        # TODO(synk): on v5e (single store port) switch to an in-register 3-way max
        # via pltpu.roll if the bundle dump shows vst as the saturated slot; a
        # lane-dense (Lp*Cout) output layout only pays off for planes < 128.
        res_scr[...] = res
        m = jnp.maximum(
            jnp.maximum(res_scr[pl.ds(0, Lp, 3), :],
                        res_scr[pl.ds(1, Lp, 3), :]),
            res_scr[pl.ds(2, Lp, 3), :])
        o_ref[...] = m[None, :, :]

    if use_align:
        return body

    def body_no_align(xp_ref, w1_ref, b_ref, wd_ref, wu_ref, o_ref, res_scr):
        return body(xp_ref, w1_ref, None, b_ref, wd_ref, wu_ref, o_ref, res_scr)

    return body_no_align


def basic_block_forward(x_ncl, params, inplanes, planes):
    """x_ncl: (B, inplanes, L) f32, PyTorch NCL layout. Returns (B, planes, L//3)."""
    eps = 1e-5
    B, Cin, L = x_ncl.shape
    assert Cin == inplanes
    assert L % 3 == 0, "maxpool tiling assumes L divisible by 3"
    Cout = planes
    Cd = planes // 16
    Lp = L // 3
    use_align = (inplanes != planes)

    # ---- layout glue: NCL -> NLC, pad L by 1 each side, bf16 MXU feed ----
    x_blc = jnp.transpose(x_ncl, (0, 2, 1)).astype(jnp.float32)
    xp = jnp.pad(x_blc, ((0, 0), (1, 1), (0, 0))).astype(jnp.bfloat16)   # (B, L+2, Cin)

    # ---- fold eval-mode BN1 into conv1 (f32), split into the 3 kernel taps ----
    s1 = params['bn1_gamma'] * jax.lax.rsqrt(params['bn1_var'] + eps)
    w1 = (jnp.transpose(params['conv1_w'], (2, 1, 0)) * s1[None, None, :]
          ).astype(jnp.bfloat16)                                          # (3, Cin, Cout)
    b1 = (params['conv1_b'] - params['bn1_mean']) * s1 + params['bn1_beta']

    if use_align:
        sa = params['bna_gamma'] * jax.lax.rsqrt(params['bna_var'] + eps)
        wa = (jnp.transpose(params['align_w'][:, :, 0], (1, 0)) * sa[None, :]
              ).astype(jnp.bfloat16)                                      # (Cin, Cout)
        ba = (params['align_b'] - params['bna_mean']) * sa + params['bna_beta']
        b = jnp.stack([b1, ba], axis=0)                                   # (2, Cout) f32
    else:
        b = b1[None, :]                                                   # (1, Cout) f32
    nb = b.shape[0]

    wd = jnp.transpose(params['down_w'][:, :, 0], (1, 0)).astype(jnp.bfloat16)  # (Cout, Cd)
    wu = jnp.transpose(params['up_w'][:, :, 0], (1, 0)).astype(jnp.bfloat16)    # (Cd, Cout)

    kernel = _make_kernel(L, Lp, Cin, Cout, use_align)

    in_specs = [pl.BlockSpec((1, L + 2, Cin), lambda g: (g, 0, 0)),   # padded activation
                pl.BlockSpec((3, Cin, Cout), lambda g: (0, 0, 0))]    # conv1 taps (bf16)
    args = [xp, w1]
    if use_align:
        in_specs.append(pl.BlockSpec((Cin, Cout), lambda g: (0, 0)))  # shortcut 1x1 conv
        args.append(wa)
    in_specs += [pl.BlockSpec((nb, Cout), lambda g: (0, 0)),          # folded biases (f32)
                 pl.BlockSpec((Cout, Cd), lambda g: (0, 0)),          # SE down
                 pl.BlockSpec((Cd, Cout), lambda g: (0, 0))]          # SE up
    args += [b, wd, wu]

    # ---- explicit VMEM budget (lane-padded per-step footprint + headroom) ----
    def _padded(r, c, bpe):
        sub = 16 if bpe == 2 else 8
        return (-(-r // sub) * sub) * (-(-c // 128) * 128) * bpe

    vmem = 2 * _padded(L + 2, Cin, 2)                                  # input dbl-buffer
    vmem += 2 * (3 * _padded(Cin, Cout, 2) + _padded(Cin, Cout, 2)
                 + _padded(Cout, Cd, 2) + _padded(Cd, Cout, 2) + _padded(nb, Cout, 4))
    vmem += 2 * _padded(Lp, Cout, 4)                                   # output dbl-buffer
    vmem += _padded(L, Cout, 4)                                        # maxpool scratch
    vmem += 8 * _padded(L, Cout, 4)                                    # live f32 slabs
    vmem_limit = int(min(max(2 * vmem, 8 << 20), 48 << 20))            # fits v7x's 64 MiB

    flops = 2 * B * L * (3 * Cin) * Cout
    if use_align:
        flops += 2 * B * L * Cin * Cout
    flops += 4 * B * Cout * Cd + 8 * B * L * Cout
    bytes_accessed = xp.size * 2 + w1.size * 2 + b.size * 4 + wd.size * 2 + wu.size * 2
    if use_align:
        bytes_accessed += wa.size * 2
    bytes_accessed += B * Lp * Cout * 4

    out_blc = pl.pallas_call(
        kernel,
        out_shape=jax.ShapeDtypeStruct((B, Lp, Cout), jnp.float32),
        grid_spec=pltpu.PrefetchScalarGridSpec(
            num_scalar_prefetch=0,
            grid=(B,),                                                 # BB=1 per step
            in_specs=in_specs,
            out_specs=pl.BlockSpec((1, Lp, Cout), lambda g: (g, 0, 0)),
            scratch_shapes=[pltpu.VMEM((L, Cout), jnp.float32)]),
        compiler_params=pltpu.CompilerParams(
            dimension_semantics=("parallel",),
            vmem_limit_bytes=vmem_limit),
        cost_estimate=pl.CostEstimate(
            flops=int(flops), transcendentals=int(B * Cout),
            bytes_accessed=int(bytes_accessed)),
    )(*args)

    # TODO(synk): for realistic SampleCNN lengths, add an L-tile grid axis with a
    # two-pass SE (mean pass, then scale pass) so each step's block stays small.
    return jnp.transpose(out_blc, (0, 2, 1))                          # (B, Cout, L//3)


def basic_block_ref(x_ncl, params, inplanes, planes):
    """Pure-JAX f32 reference mirroring the PyTorch forward (BN in eval mode)."""
    eps = 1e-5

    def conv1d(x, w, b=None, pad=0):
        y = jax.lax.conv_general_dilated(
            x, w, window_strides=(1,), padding=[(pad, pad)],
            dimension_numbers=('NCH', 'OIH', 'NCH'))
        if b is not None:
            y = y + b[None, :, None]
        return y

    def bn(x, g, bta, m, v):
        return ((x - m[None, :, None]) * jax.lax.rsqrt(v[None, :, None] + eps)
                * g[None, :, None] + bta[None, :, None])

    out = conv1d(x_ncl, params['conv1_w'], params['conv1_b'], pad=1)
    out = jnp.maximum(bn(out, params['bn1_gamma'], params['bn1_beta'],
                         params['bn1_mean'], params['bn1_var']), 0.0)
    if inplanes != planes:
        sc = conv1d(x_ncl, params['align_w'], params['align_b'], pad=0)
        sc = bn(sc, params['bna_gamma'], params['bna_beta'],
                params['bna_mean'], params['bna_var'])
    else:
        sc = x_ncl
    pooled = jnp.mean(out, axis=2, keepdims=True)
    down = jnp.maximum(conv1d(pooled, params['down_w']), 0.0)
    up = jax.nn.sigmoid(conv1d(down, params['up_w']))
    res = jnp.maximum(up * out + sc, 0.0)
    B, C, L = res.shape
    Lp = L // 3
    return jnp.max(res[:, :, :3 * Lp].reshape(B, C, Lp, 3), axis=-1)


def make_params(key, inplanes, planes):
    Cd = planes // 16
    ks = jax.random.split(key, 12)
    n = lambda k, s, sc=0.1: sc * jax.random.normal(k, s, dtype=jnp.float32)
    return {
        'conv1_w': n(ks[0], (planes, inplanes, 3)),
        'conv1_b': n(ks[1], (planes,)),
        'bn1_gamma': 1.0 + n(ks[2], (planes,)),
        'bn1_beta': n(ks[3], (planes,)),
        'bn1_mean': n(ks[4], (planes,)),
        'bn1_var': 0.5 + jnp.abs(n(ks[5], (planes,), 0.5)),
        'align_w': n(ks[6], (planes, inplanes, 1)),
        'align_b': n(ks[7], (planes,)),
        'bna_gamma': 1.0 + n(ks[8], (planes,)),
        'bna_beta': n(ks[9], (planes,)),
        'bna_mean': n(ks[10], (planes,)),
        'bna_var': 0.5 + jnp.abs(n(ks[11], (planes,), 0.5)),
        'down_w': n(jax.random.fold_in(key, 100), (Cd, planes, 1), 0.2),
        'up_w': n(jax.random.fold_in(key, 101), (planes, Cd, 1), 0.2),
    }


if __name__ == "__main__":
    key = jax.random.PRNGKey(0)
    fwd = jax.jit(basic_block_forward, static_argnums=(2, 3))

    # Exercise both paths: aligned-conv shortcut (inplanes != planes) and identity.
    for inplanes, planes in [(16, 32), (32, 32)]:
        B, L = 4, 48                       # L divisible by 3 for MaxPool1d(3, 3)
        kx, kp = jax.random.split(jax.random.fold_in(key, 7 * inplanes + planes))
        x = jax.random.normal(kx, (B, inplanes, L), dtype=jnp.float32)
        params = make_params(kp, inplanes, planes)

        out = jax.block_until_ready(fwd(x, params, inplanes, planes))
        ref = basic_block_ref(x, params, inplanes, planes)

        assert out.shape == (B, planes, L // 3), out.shape
        # bf16 MXU feed vs f32 reference -> relaxed tolerance.
        err = float(jnp.max(jnp.abs(out - ref)))
        assert jnp.allclose(out, ref, rtol=3e-2, atol=3e-2), err

    print("KERNEL_OK")
</pallas_src>

<mosaic_0001>
module attributes {stable_mosaic.version = 11 : i64} {
  func.func @body(%arg0: i32, %arg1: memref<1x50x16xbf16, #tpu.memory_space<vmem>>, %arg2: memref<3x16x32xbf16, #tpu.memory_space<vmem>>, %arg3: memref<16x32xbf16, #tpu.memory_space<vmem>>, %arg4: memref<2x32xf32, #tpu.memory_space<vmem>>, %arg5: memref<32x2xbf16, #tpu.memory_space<vmem>>, %arg6: memref<2x32xbf16, #tpu.memory_space<vmem>>, %arg7: memref<1x16x32xf32, #tpu.memory_space<vmem>>, %arg8: memref<48x32xf32, #tpu.memory_space<vmem>>) attributes {dimension_semantics = [#tpu.dimension_semantics<parallel>], iteration_bounds = array<i64: 4>, scalar_prefetch = 0 : i64, scratch_operands = 1 : i64, tpu.core_type = #tpu.core_type<tc>, window_params = [{transform_indices = @transform_0, window_bounds = array<i64: 1, 50, 16>}, {pipeline_mode = #tpu.pipeline_mode<synchronous>, transform_indices = @transform_1, window_bounds = array<i64: 3, 16, 32>}, {pipeline_mode = #tpu.pipeline_mode<synchronous>, transform_indices = @transform_2, window_bounds = array<i64: 16, 32>}, {pipeline_mode = #tpu.pipeline_mode<synchronous>, transform_indices = @transform_3, window_bounds = array<i64: 2, 32>}, {pipeline_mode = #tpu.pipeline_mode<synchronous>, transform_indices = @transform_4, window_bounds = array<i64: 32, 2>}, {pipeline_mode = #tpu.pipeline_mode<synchronous>, transform_indices = @transform_5, window_bounds = array<i64: 2, 32>}, {transform_indices = @transform_6, window_bounds = array<i64: 1, 16, 32>}]} {
    %c0 = arith.constant 0 : index
    %c0_0 = arith.constant 0 : index
    %c0_1 = arith.constant 0 : index
    %0 = vector.load %arg1[%c0, %c0_0, %c0_1] : memref<1x50x16xbf16, #tpu.memory_space<vmem>>, vector<1x48x16xbf16>
    %1 = vector.shape_cast %0 : vector<1x48x16xbf16> to vector<48x16xbf16>
    %c0_2 = arith.constant 0 : index
    %c1 = arith.constant 1 : index
    %c0_3 = arith.constant 0 : index
    %2 = vector.load %arg1[%c0_2, %c1, %c0_3] : memref<1x50x16xbf16, #tpu.memory_space<vmem>>, vector<1x48x16xbf16>
    %3 = vector.shape_cast %2 : vector<1x48x16xbf16> to vector<48x16xbf16>
    %c0_4 = arith.constant 0 : index
    %c2 = arith.constant 2 : index
    %c0_5 = arith.constant 0 : index
    %4 = vector.load %arg1[%c0_4, %c2, %c0_5] : memref<1x50x16xbf16, #tpu.memory_space<vmem>>, vector<1x48x16xbf16>
    %5 = vector.shape_cast %4 : vector<1x48x16xbf16> to vector<48x16xbf16>
    %c0_6 = arith.constant 0 : index
    %c0_7 = arith.constant 0 : index
    %c0_8 = arith.constant 0 : index
    %6 = vector.load %arg2[%c0_6, %c0_7, %c0_8] : memref<3x16x32xbf16, #tpu.memory_space<vmem>>, vector<1x16x32xbf16>
    %7 = vector.shape_cast %6 : vector<1x16x32xbf16> to vector<16x32xbf16>
    %cst = arith.constant dense<0.000000e+00> : vector<48x32xf32>
    %8 = tpu.matmul %1, %7, %cst {dimension_numbers = #tpu.dot_dimension_numbers<[1], [0], [0], [1], [0, 0, 1, 1], [], []>} : vector<48x16xbf16>, vector<16x32xbf16>, vector<48x32xf32> -> vector<48x32xf32>
    %c1_9 = arith.constant 1 : index
    %c0_10 = arith.constant 0 : index
    %c0_11 = arith.constant 0 : index
    %9 = vector.load %arg2[%c1_9, %c0_10, %c0_11] : memref<3x16x32xbf16, #tpu.memory_space<vmem>>, vector<1x16x32xbf16>
    %10 = vector.shape_cast %9 : vector<1x16x32xbf16> to vector<16x32xbf16>
    %cst_12 = arith.constant dense<0.000000e+00> : vector<48x32xf32>
    %11 = tpu.matmul %3, %10, %cst_12 {dimension_numbers = #tpu.dot_dimension_numbers<[1], [0], [0], [1], [0, 0, 1, 1], [], []>} : vector<48x16xbf16>, vector<16x32xbf16>, vector<48x32xf32> -> vector<48x32xf32>
    %12 = arith.addf %8, %11 : vector<48x32xf32>
    %c2_13 = arith.constant 2 : index
    %c0_14 = arith.constant 0 : index
    %c0_15 = arith.constant 0 : index
    %13 = vector.load %arg2[%c2_13, %c0_14, %c0_15] : memref<3x16x32xbf16, #tpu.memory_space<vmem>>, vector<1x16x32xbf16>
    %14 = vector.shape_cast %13 : vector<1x16x32xbf16> to vector<16x32xbf16>
    %cst_16 = arith.constant dense<0.000000e+00> : vector<48x32xf32>
    %15 = tpu.matmul %5, %14, %cst_16 {dimension_numbers = #tpu.dot_dimension_numbers<[1], [0], [0], [1], [0, 0, 1, 1], [], []>} : vector<48x16xbf16>, vector<16x32xbf16>, vector<48x32xf32> -> vector<48x32xf32>
    %16 = arith.addf %12, %15 : vector<48x32xf32>
    %c0_17 = arith.constant 0 : index
    %c0_18 = arith.constant 0 : index
    %17 = vector.load %arg4[%c0_17, %c0_18] : memref<2x32xf32, #tpu.memory_space<vmem>>, vector<1x32xf32>
    %18 = vector.broadcast %17 : vector<1x32xf32> to vector<48x32xf32>
    %19 = arith.addf %16, %18 : vector<48x32xf32>
    %cst_19 = arith.constant 0.000000e+00 : f32
    %20 = vector.broadcast %cst_19 : f32 to vector<48x32xf32>
    %21 = arith.maximumf %19, %20 : vector<48x32xf32>
    %c0_20 = arith.constant 0 : index
    %c0_21 = arith.constant 0 : index
    %22 = vector.load %arg3[%c0_20, %c0_21] : memref<16x32xbf16, #tpu.memory_space<vmem>>, vector<16x32xbf16>
    %cst_22 = arith.constant dense<0.000000e+00> : vector<48x32xf32>
    %23 = tpu.matmul %3, %22, %cst_22 {dimension_numbers = #tpu.dot_dimension_numbers<[1], [0], [0], [1], [0, 0, 1, 1], [], []>} : vector<48x16xbf16>, vector<16x32xbf16>, vector<48x32xf32> -> vector<48x32xf32>
    %c1_23 = arith.constant 1 : index
    %c0_24 = arith.constant 0 : index
    %24 = vector.load %arg4[%c1_23, %c0_24] : memref<2x32xf32, #tpu.memory_space<vmem>>, vector<1x32xf32>
    %25 = vector.broadcast %24 : vector<1x32xf32> to vector<48x32xf32>
    %26 = arith.addf %23, %25 : vector<48x32xf32>
    %cst_25 = arith.constant dense<0.000000e+00> : vector<32xf32>
    %27 = vector.multi_reduction <add>, %21, %cst_25 [0] : vector<48x32xf32> to vector<32xf32>
    %28 = vector.shape_cast %27 : vector<32xf32> to vector<1x32xf32>
    %cst_26 = arith.constant 4.800000e+01 : f32
    %29 = vector.broadcast %cst_26 : f32 to vector<1x32xf32>
    %30 = arith.divf %28, %29 : vector<1x32xf32>
    %31 = arith.truncf %30 : vector<1x32xf32> to vector<1x32xbf16>
    %c0_27 = arith.constant 0 : index
    %c0_28 = arith.constant 0 : index
    %32 = vector.load %arg5[%c0_27, %c0_28] : memref<32x2xbf16, #tpu.memory_space<vmem>>, vector<32x2xbf16>
    %cst_29 = arith.constant dense<0.000000e+00> : vector<1x2xf32>
    %33 = tpu.matmul %31, %32, %cst_29 {dimension_numbers = #tpu.dot_dimension_numbers<[1], [0], [0], [1], [0, 0, 1, 1], [], []>} : vector<1x32xbf16>, vector<32x2xbf16>, vector<1x2xf32> -> vector<1x2xf32>
    %cst_30 = arith.constant 0.000000e+00 : f32
    %34 = vector.broadcast %cst_30 : f32 to vector<1x2xf32>
    %35 = arith.maximumf %33, %34 : vector<1x2xf32>
    %36 = arith.truncf %35 : vector<1x2xf32> to vector<1x2xbf16>
    %c0_31 = arith.constant 0 : index
    %c0_32 = arith.constant 0 : index
    %37 = vector.load %arg6[%c0_31, %c0_32] : memref<2x32xbf16, #tpu.memory_space<vmem>>, vector<2x32xbf16>
    %cst_33 = arith.constant dense<0.000000e+00> : vector<1x32xf32>
    %38 = tpu.matmul %36, %37, %cst_33 {dimension_numbers = #tpu.dot_dimension_numbers<[1], [0], [0], [1], [0, 0, 1, 1], [], []>} : vector<1x2xbf16>, vector<2x32xbf16>, vector<1x32xf32> -> vector<1x32xf32>
    %39 = arith.negf %38 : vector<1x32xf32>
    %40 = math.exp %39 : vector<1x32xf32>
    %cst_34 = arith.constant 1.000000e+00 : f32
    %41 = vector.broadcast %cst_34 : f32 to vector<1x32xf32>
    %42 = arith.addf %41, %40 : vector<1x32xf32>
    %43 = arith.divf %41, %42 : vector<1x32xf32>
    %44 = vector.broadcast %43 : vector<1x32xf32> to vector<48x32xf32>
    %45 = arith.mulf %21, %44 : vector<48x32xf32>
    %46 = arith.addf %45, %26 : vector<48x32xf32>
    %cst_35 = arith.constant 0.000000e+00 : f32
    %47 = vector.broadcast %cst_35 : f32 to vector<48x32xf32>
    %48 = arith.maximumf %46, %47 : vector<48x32xf32>
    %c0_36 = arith.constant 0 : index
    %c0_37 = arith.constant 0 : index
    %49 = vector.load %arg8[%c0_36, %c0_37] : memref<48x32xf32, #tpu.memory_space<vmem>>, vector<48x32xf32>
    tpu.vector_store %arg8[%c0_36, %c0_37], %48 {strides = array<i32>} : memref<48x32xf32, #tpu.memory_space<vmem>>, vector<48x32xf32>,
    %c0_38 = arith.constant 0 : index
    %c0_39 = arith.constant 0 : index
    %50 = tpu.strided_load %arg8[%c0_38, %c0_39] {strides = array<i32: 3, 1>} : memref<48x32xf32, #tpu.memory_space<vmem>>, vector<16x32xf32>
    %c1_40 = arith.constant 1 : index
    %c0_41 = arith.constant 0 : index
    %51 = tpu.strided_load %arg8[%c1_40, %c0_41] {strides = array<i32: 3, 1>} : memref<48x32xf32, #tpu.memory_space<vmem>>, vector<16x32xf32>
    %52 = arith.maximumf %50, %51 : vector<16x32xf32>
    %c2_42 = arith.constant 2 : index
    %c0_43 = arith.constant 0 : index
    %53 = tpu.strided_load %arg8[%c2_42, %c0_43] {strides = array<i32: 3, 1>} : memref<48x32xf32, #tpu.memory_space<vmem>>, vector<16x32xf32>
    %54 = arith.maximumf %52, %53 : vector<16x32xf32>
    %55 = vector.shape_cast %54 : vector<16x32xf32> to vector<1x16x32xf32>
    %c0_44 = arith.constant 0 : index
    %c0_45 = arith.constant 0 : index
    %c0_46 = arith.constant 0 : index
    %56 = vector.load %arg7[%c0_44, %c0_45, %c0_46] : memref<1x16x32xf32, #tpu.memory_space<vmem>>, vector<1x16x32xf32>
    tpu.vector_store %arg7[%c0_44, %c0_45, %c0_46], %55 {strides = array<i32>} : memref<1x16x32xf32, #tpu.memory_space<vmem>>, vector<1x16x32xf32>,
    return
  }
  func.func @transform_0(%arg0: i32) -> (i32, i32, i32) {
    %c0_i32 = arith.constant 0 : i32
    %c0_i32_0 = arith.constant 0 : i32
    %c0_i32_1 = arith.constant 0 : i32
    return %arg0, %c0_i32, %c0_i32_0 : i32, i32, i32
  }
  func.func @transform_1(%arg0: i32) -> (i32, i32, i32) {
    %c0_i32 = arith.constant 0 : i32
    %c0_i32_0 = arith.constant 0 : i32
    %c0_i32_1 = arith.constant 0 : i32
    %c0_i32_2 = arith.constant 0 : i32
    return %c0_i32, %c0_i32_0, %c0_i32_1 : i32, i32, i32
  }
  func.func @transform_2(%arg0: i32) -> (i32, i32) {
    %c0_i32 = arith.constant 0 : i32
    %c0_i32_0 = arith.constant 0 : i32
    %c0_i32_1 = arith.constant 0 : i32
    return %c0_i32, %c0_i32_0 : i32, i32
  }
  func.func @transform_3(%arg0: i32) -> (i32, i32) {
    %c0_i32 = arith.constant 0 : i32
    %c0_i32_0 = arith.constant 0 : i32
    %c0_i32_1 = arith.constant 0 : i32
    return %c0_i32, %c0_i32_0 : i32, i32
  }
  func.func @transform_4(%arg0: i32) -> (i32, i32) {
    %c0_i32 = arith.constant 0 : i32
    %c0_i32_0 = arith.constant 0 : i32
    %c0_i32_1 = arith.constant 0 : i32
    return %c0_i32, %c0_i32_0 : i32, i32
  }
  func.func @transform_5(%arg0: i32) -> (i32, i32) {
    %c0_i32 = arith.constant 0 : i32
    %c0_i32_0 = arith.constant 0 : i32
    %c0_i32_1 = arith.constant 0 : i32
    return %c0_i32, %c0_i32_0 : i32, i32
  }
  func.func @transform_6(%arg0: i32) -> (i32, i32, i32) {
    %c0_i32 = arith.constant 0 : i32
    %c0_i32_0 = arith.constant 0 : i32
    %c0_i32_1 = arith.constant 0 : i32
    return %arg0, %c0_i32, %c0_i32_0 : i32, i32, i32
  }
}

</mosaic_0001>

<llo_original>
// kernel: basic_block_forward.1
$region0: #{basic_block_forward.1}
  #allocation0 [shape = 'u32[]', space=smem, size = 0x4, offset = 0x4, fixed_abs, tag = 'smem constant byte address 0x4 - core index']
  #allocation1 [shape = 'u32[144,128]{1,0:T(1,128)}', space=vmem, size = 0x12000, scoped, tag = 'internal scratch']
  #allocation2 [shape = 'f32[48,32]{1,0:T(8,128)}', space=vmem, size = 0x6000, scoped, tag = 'scratch operand']
  %s0 = inlined_call_operand.vmem [shape: bf16[4,50,16], index: 0, kind: input, shape index: {}]
  %s1 = inlined_call_operand.vmem [shape: bf16[3,16,32], index: 1, kind: input, shape index: {}]
  %s2 = inlined_call_operand.vmem [shape: bf16[16,32], index: 2, kind: input, shape index: {}]
  %s3 = inlined_call_operand.vmem [shape: f32[2,32], index: 3, kind: input, shape index: {}]
  %s4 = inlined_call_operand.vmem [shape: bf16[32,2], index: 4, kind: input, shape index: {}]
  %s5 = inlined_call_operand.vmem [shape: bf16[2,32], index: 5, kind: input, shape index: {}]
  %s6 = inlined_call_operand.hbm [shape: f32[4,16,32], index: 6, kind: output, shape index: {}]
  %s7 = sld [smem:[#allocation0]]
  $region57: #{basic_block_forward.1} parent=0
    _
  %s9 = ssub.s32 1, %s7
  %s10 = scalar_select 0, %s9, %s7
  $region1: #{basic_block_forward.1} parent=0
    #allocation3 [shape = 'u8[16384]{0}', space=vmem, size = 0x4000, scoped, tag = 'output window, operand 0']
    #allocation4 [shape = 's32[2]{0}', space=sflag, size = 0x8, scoped, tag = 'scoped memory for basic_block_forward.1']
    %11 = vsyncpa [#allocation4], 0
    %s12 = scalar_lea.sflag [#allocation4], 1
    %13 = vsyncpa %s12, 0
    loop: start=0, step=1, limit=6
    $region2: #{basic_block_forward.1} parent=1 // loop_pre_header
      _
    $region3: #{basic_block_forward.1} parent=1 // loop_header
      %s15 = sphi 0, %s19
      %p16 = scmp.ge.s32.totalorder %s15, 6
      %s25 = sphi 0, %s27
      %s28 = sphi 0, %s25
      %s29 = sphi 0, %s28
      %s45 = sphi 0, %s29
      %s49 = sphi 0, %s49
      %s51 = sphi 0, %s49
      %s52 = sphi 0, %s51
      %s66 = sphi 0, %s52
      %s70 = sphi 0, %s70
      %s72 = sphi 0, %s70
      %s73 = sphi 0, %s72
      %s87 = sphi 0, %s73
      %s91 = sphi 0, %s91
      %s93 = sphi 0, %s91
      %s94 = sphi 0, %s93
      %s108 = sphi 0, %s94
      %s112 = sphi 0, %s112
      %s114 = sphi 0, %s112
      %s115 = sphi 0, %s114
      %s129 = sphi 0, %s115
      %s133 = sphi 0, %s133
      %s135 = sphi 0, %s133
      %s136 = sphi 0, %s135
      %s150 = sphi 0, %s136
      %s156 = sphi 0, %s158
      %s159 = sphi 0, %s156
      %s160 = sphi 0, %s159
      %s176 = sphi 0, %s160
    $region4: #{basic_block_forward.1} parent=1 // loop_header_branch
      %18 = sbr.rel (%p16) target = $region8
    $region5: #{basic_block_forward.1} parent=1 // loop_body
      %s20 = ssub.s32 %s15, 1
      %s21 = ssub.s32 %s15, 2
      %s22 = sadd.s32 %s15, 1
      %s23 = ssub.s32 %s15, %s22
      %p24 = scmp.eq.s32.totalorder %s23, 0
      %s26 = sadd.s32 %s25, 1
      %s27 = scalar_select %p24, %s25, %s26
      %p30 = pneg %p24
      %p31 = scmp.eq.s32.totalorder %s15, 3
      %p32 = por %p30, %p31
      %p33 = scmp.ne.s32.totalorder %s25, %s28
      %p34 = scmp.eq.s32.totalorder %s15, 0
      %p35 = por %p33, %p34
      %p36 = scmp.ne.s32.totalorder %s25, %s28
      %p37 = scmp.eq.s32.totalorder %s20, 3
      %p38 = por %p36, %p37
      %p39 = scmp.ne.s32.totalorder %s28, %s29
      %p40 = scmp.eq.s32.totalorder %s20, 0
      %p41 = por %p39, %p40
      %p42 = scmp.ne.s32.totalorder %s28, %s29
      %p43 = scmp.eq.s32.totalorder %s21, 3
      %p44 = por %p42, %p43
      %p46 = scmp.ne.s32.totalorder %s29, %s45
      %p47 = scmp.eq.s32.totalorder %s21, 0
      %p48 = por %p46, %p47
      %s50 = sadd.s32 %s49, 1
      %p53 = scmp.eq.s32.totalorder %s15, 3
      %p54 = scmp.ne.s32.totalorder %s49, %s51
      %p55 = scmp.eq.s32.totalorder %s15, 0
      %p56 = por %p54, %p55
      %p57 = scmp.ne.s32.totalorder %s49, %s51
      %p58 = scmp.eq.s32.totalorder %s20, 3
      %p59 = por %p57, %p58
      %p60 = scmp.ne.s32.totalorder %s51, %s52
      %p61 = scmp.eq.s32.totalorder %s20, 0
      %p62 = por %p60, %p61
      %p63 = scmp.ne.s32.totalorder %s51, %s52
      %p64 = scmp.eq.s32.totalorder %s21, 3
      %p65 = por %p63, %p64
      %p67 = scmp.ne.s32.totalorder %s52, %s66
      %p68 = scmp.eq.s32.totalorder %s21, 0
      %p69 = por %p67, %p68
      %s71 = sadd.s32 %s70, 1
      %p74 = scmp.eq.s32.totalorder %s15, 3
      %p75 = scmp.ne.s32.totalorder %s70, %s72
      %p76 = scmp.eq.s32.totalorder %s15, 0
      %p77 = por %p75, %p76
      %p78 = scmp.ne.s32.totalorder %s70, %s72
      %p79 = scmp.eq.s32.totalorder %s20, 3
      %p80 = por %p78, %p79
      %p81 = scmp.ne.s32.totalorder %s72, %s73
      %p82 = scmp.eq.s32.totalorder %s20, 0
      %p83 = por %p81, %p82
      %p84 = scmp.ne.s32.totalorder %s72, %s73
      %p85 = scmp.eq.s32.totalorder %s21, 3
      %p86 = por %p84, %p85
      %p88 = scmp.ne.s32.totalorder %s73, %s87
      %p89 = scmp.eq.s32.totalorder %s21, 0
      %p90 = por %p88, %p89
      %s92 = sadd.s32 %s91, 1
      %p95 = scmp.eq.s32.totalorder %s15, 3
      %p96 = scmp.ne.s32.totalorder %s91, %s93
      %p97 = scmp.eq.s32.totalorder %s15, 0
      %p98 = por %p96, %p97
      %p99 = scmp.ne.s32.totalorder %s91, %s93
      %p100 = scmp.eq.s32.totalorder %s20, 3
      %p101 = por %p99, %p100
      %p102 = scmp.ne.s32.totalorder %s93, %s94
      %p103 = scmp.eq.s32.totalorder %s20, 0
      %p104 = por %p102, %p103
      %p105 = scmp.ne.s32.totalorder %s93, %s94
      %p106 = scmp.eq.s32.totalorder %s21, 3
      %p107 = por %p105, %p106
      %p109 = scmp.ne.s32.totalorder %s94, %s108
      %p110 = scmp.eq.s32.totalorder %s21, 0
      %p111 = por %p109, %p110
      %s113 = sadd.s32 %s112, 1
      %p116 = scmp.eq.s32.totalorder %s15, 3
      %p117 = scmp.ne.s32.totalorder %s112, %s114
      %p118 = scmp.eq.s32.totalorder %s15, 0
      %p119 = por %p117, %p118
      %p120 = scmp.ne.s32.totalorder %s112, %s114
      %p121 = scmp.eq.s32.totalorder %s20, 3
      %p122 = por %p120, %p121
      %p123 = scmp.ne.s32.totalorder %s114, %s115
      %p124 = scmp.eq.s32.totalorder %s20, 0
      %p125 = por %p123, %p124
      %p126 = scmp.ne.s32.totalorder %s114, %s115
      %p127 = scmp.eq.s32.totalorder %s21, 3
      %p128 = por %p126, %p127
      %p130 = scmp.ne.s32.totalorder %s115, %s129
      %p131 = scmp.eq.s32.totalorder %s21, 0
      %p132 = por %p130, %p131
      %s134 = sadd.s32 %s133, 1
      %p137 = scmp.eq.s32.totalorder %s15, 3
      %p138 = scmp.ne.s32.totalorder %s133, %s135
      %p139 = scmp.eq.s32.totalorder %s15, 0
      %p140 = por %p138, %p139
      %p141 = scmp.ne.s32.totalorder %s133, %s135
      %p142 = scmp.eq.s32.totalorder %s20, 3
      %p143 = por %p141, %p142
      %p144 = scmp.ne.s32.totalorder %s135, %s136
      %p145 = scmp.eq.s32.totalorder %s20, 0
      %p146 = por %p144, %p145
      %p147 = scmp.ne.s32.totalorder %s135, %s136
      %p148 = scmp.eq.s32.totalorder %s21, 3
      %p149 = por %p147, %p148
      %p151 = scmp.ne.s32.totalorder %s136, %s150
      %p152 = scmp.eq.s32.totalorder %s21, 0
      %p153 = por %p151, %p152
      %s154 = ssub.s32 %s15, %s22
      %p155 = scmp.eq.s32.totalorder %s154, 0
      %s157 = sadd.s32 %s156, 1
      %s158 = scalar_select %p155, %s156, %s157
      %p161 = pneg %p155
      %p162 = scmp.eq.s32.totalorder %s15, 3
      %p163 = por %p161, %p162
      %p164 = scmp.ne.s32.totalorder %s156, %s159
      %p165 = scmp.eq.s32.totalorder %s15, 0
      %p166 = por %p164, %p165
      %p167 = scmp.ne.s32.totalorder %s156, %s159
      %p168 = scmp.eq.s32.totalorder %s20, 3
      %p169 = por %p167, %p168
      %p170 = scmp.ne.s32.totalorder %s159, %s160
      %p171 = scmp.eq.s32.totalorder %s20, 0
      %p172 = por %p170, %p171
      %p173 = scmp.ne.s32.totalorder %s159, %s160
      %p174 = scmp.eq.s32.totalorder %s21, 3
      %p175 = por %p173, %p174
      %p177 = scmp.ne.s32.totalorder %s160, %s176
      %p178 = scmp.eq.s32.totalorder %s21, 0
      %p179 = por %p177, %p178
      %p180 = scmp.le.s32.totalorder 1, %s15
      %p181 = scmp.lt.s32.totalorder %s15, 5
      %p182 = pnand %p180, %p181
      %p183 = pneg %p182
      // Predicated region
      $region9: #{basic_block_forward.1} parent=5 // pred_check
        _
      $region10: #{basic_block_forward.1} parent=5 // pred_check_branch
        %185 = sbr.rel (%p182) target = $region12
      $region11: #{basic_block_forward.1} parent=5 // pred_region
        %s186 = ssub.s32 %s15, 1
        // Predicated region
        $region13: #{basic_block_forward.1} parent=11 // pred_check
          %p187 = pneg %p62
        $region14: #{basic_block_forward.1} parent=11 // pred_check_branch
          %189 = sbr.rel (%p187) target = $region16
        $region15: #{basic_block_forward.1} parent=11 // pred_region
          _
        $region16: #{basic_block_forward.1} parent=11 // pred_fallthru
          _
        // Predicated region
        $region17: #{basic_block_forward.1} parent=11 // pred_check
          %p190 = pneg %p83
        $region18: #{basic_block_forward.1} parent=11 // pred_check_branch
          %192 = sbr.rel (%p190) target = $region20
        $region19: #{basic_block_forward.1} parent=11 // pred_region
          _
        $region20: #{basic_block_forward.1} parent=11 // pred_fallthru
          _
        // Predicated region
        $region21: #{basic_block_forward.1} parent=11 // pred_check
          %p193 = pneg %p104
        $region22: #{basic_block_forward.1} parent=11 // pred_check_branch
          %195 = sbr.rel (%p193) target = $region24
        $region23: #{basic_block_forward.1} parent=11 // pred_region
          _
        $region24: #{basic_block_forward.1} parent=11 // pred_fallthru
          _
        // Predicated region
        $region25: #{basic_block_forward.1} parent=11 // pred_check
          %p196 = pneg %p125
        $region26: #{basic_block_forward.1} parent=11 // pred_check_branch
          %198 = sbr.rel (%p196) target = $region28
        $region27: #{basic_block_forward.1} parent=11 // pred_region
          _
        $region28: #{basic_block_forward.1} parent=11 // pred_fallthru
          _
        // Predicated region
        $region29: #{basic_block_forward.1} parent=11 // pred_check
          %p199 = pneg %p146
        $region30: #{basic_block_forward.1} parent=11 // pred_check_branch
          %201 = sbr.rel (%p199) target = $region32
        $region31: #{basic_block_forward.1} parent=11 // pred_region
          _
        $region32: #{basic_block_forward.1} parent=11 // pred_fallthru
          _
      $region12: #{basic_block_forward.1} parent=5 // pred_fallthru
        _
      %p202 = scmp.lt.s32.totalorder %s15, 4
      // Predicated region
      $region33: #{basic_block_forward.1} parent=5 // pred_check
        %p203 = pneg %p202
      $region34: #{basic_block_forward.1} parent=5 // pred_check_branch
        %205 = sbr.rel (%p203) target = $region36
      $region35: #{basic_block_forward.1} parent=5 // pred_region
        // Predicated region
        $region37: #{basic_block_forward.1} parent=35 // pred_check
          %p206 = pneg %p35
        $region38: #{basic_block_forward.1} parent=35 // pred_check_branch
          %208 = sbr.rel (%p206) target = $region40
        $region39: #{basic_block_forward.1} parent=35 // pred_region
          %p209 = scmp.lt.s32.totalorder %s15, 3
          %s210 = scalar_select %p209, %s15, 3
          %s211 = smul.addr %s210, 7
          %s212 = smul.addr %s211, 4
          %s213 = scalar_lea.vmem %s0, %s212
        $region40: #{basic_block_forward.1} parent=35 // pred_fallthru
          _
      $region36: #{basic_block_forward.1} parent=5 // pred_fallthru
        _
      %p214 = scmp.le.s32.totalorder 1, %s15
      %p215 = scmp.lt.s32.totalorder %s15, 5
      %p216 = pnand %p214, %p215
      %p217 = pneg %p216
      // Predicated region
      $region41: #{basic_block_forward.1} parent=5 // pred_check
        _
      $region42: #{basic_block_forward.1} parent=5 // pred_check_branch
        %219 = sbr.rel (%p216) target = $region44
      $region43: #{basic_block_forward.1} parent=5 // pred_region
        %s220 = ssub.s32 %s15, 1
        %p221 = scmp.lt.s32.totalorder %s20, 3
        %s222 = scalar_select %p221, %s20, 3
        %s223 = smul.addr %s222, 7
        %s224 = smul.addr %s223, 4
        %s225 = scalar_lea.vmem %s0, %s224
        %p226 = pneg %p41
        %p227 = pneg %p38
        %p228 = pneg %p62
        %p229 = pneg %p59
        %p230 = pneg %p83
        %p231 = pneg %p80
        %p232 = pneg %p104
        %p233 = pneg %p101
        %p234 = pneg %p125
        %p235 = pneg %p122
        %p236 = pneg %p146
        %p237 = pneg %p143
        %p238 = pneg %p172
        %p239 = pneg %p169
        %s240 = sand.u32 %s159, 1
        %s241 = scalar_lea.sflag [#allocation4], %s240
        %s242 = sand.u32 %s159, 1
        %s243 = smul.addr %s242, 16
        %s244 = scalar_lea.vmem [#allocation3], %s243
        %p245 = scmp.lt.s32.totalorder %s20, 3
        %s246 = scalar_select %p245, %s20, 3
        %s247 = smul.addr %s246, 7
        %s248 = smul.addr %s247, 4
        %s249 = scalar_lea.vmem %s0, %s248
        %v251 = vld [vmem:[%s249] sm:$0xf]
        %v252 = vld [vmem:[%s249 + $0x4] sm:$0xf]
        %v253 = vld [vmem:[%s249 + $0x8] sm:$0xf]
        %v254 = vld [vmem:[%s249 + $0xc] sm:$0xf]
        %v255 = vld [vmem:[%s249 + $0x10] sm:$0xf]
        %v256 = vld [vmem:[%s249 + $0x14] sm:$0xf]
        %v257 = vld [vmem:[%s249 + $0x18] sm:$0x1]
        %v258 = vld [vmem:[%s249] sm:$0xe]
        %v259 = vld [vmem:[%s1] sm:$0xf]
        %v260 = vld [vmem:[%s1 + $0x4] sm:$0xf]
        %s261 = scalar_lea.vmem %s1, 8
        %v262 = vld [vmem:[%s261] sm:$0xf]
        %v263 = vld [vmem:[%s261 + $0x4] sm:$0xf]
        %v271 = vunpack.c.l.b16 %v251
        %v272 = vunpack.c.l.b16 %v252
        %v273 = vunpack.c.l.b16 %v253
        %v274 = vunpack.c.l.b16 %v254
        %v275 = vunpack.c.l.b16 %v255
        %v276 = vunpack.c.l.b16 %v256
        %v277 = vunpack.c.l.b16 %v257
        %v278 = vpack.c.b16 %v272, %v271
        %v279 = vpack.c.b16 %v274, %v273
        %v280 = vpack.c.b16 %v276, %v275
        %v281 = vpack.c.b16 %v277, %v277
        %vm282 = vsmask.f32 7424
        %v284 = vshrl.u32 %v278, 16
        %v286 = vshll.u32 %v278, 16
        %v288 = vrot.slane %v286, 1
        %v289 = vor.u32 %v284, %v288
        %v291 = vshll.u32 %v279, 16
        %v293 = vrot.slane %v291, 1
        %v294 = vsel %vm282, %v289, %v293
        %v295 = vshrl.u32 %v279, 16
        %v297 = vor.u32 %v295, %v293
        %v299 = vshll.u32 %v280, 16
        %v301 = vrot.slane %v299, 1
        %v302 = vsel %vm282, %v297, %v301
        %v303 = vshrl.u32 %v280, 16
        %v305 = vor.u32 %v303, %v301
        %v307 = vshll.u32 %v281, 16
        %v309 = vrot.slane %v307, 1
        %v310 = vsel %vm282, %v305, %v309
        %v313 = vunpack.c.l.b16 %v262
        %v314 = vunpack.c.l.b16 %v263
        %v315 = vpack.c.b16 %v314, %v313
        %vm317 = vcmask 130048
        %v319 = vsel %vm317, %v294, 0
        %v322 = vsel %vm317, %v302, 0
        %v325 = vsel %vm317, %v310, 0
        %327 = vmatprep.subr.bf16.mxu0 0
        %328 = vmatpush1.bf16.msra.mxu0 %v315
        %329 = vmatprep.subr.bf16.mxu0 0
        %330 = vmatpush1.bf16.msra.mxu0 0
        %331 = vmatprep.subr.bf16.mxu0 0
        %332 = vmatpush1.bf16.msra.mxu0 0
        %333 = vmatprep.subr.bf16.mxu0 0
        %334 = vmatpush1.bf16.msra.mxu0 0
        %335 = vmatprep.subr.bf16.mxu0 0
        %336 = vmatpush1.bf16.msra.mxu0 0
        %337 = vmatprep.subr.bf16.mxu0 0
        %338 = vmatpush1.bf16.msra.mxu0 0
        %339 = vmatprep.subr.bf16.mxu0 0
        %340 = vmatpush1.bf16.msra.mxu0 0
        %341 = vmatprep.subr.bf16.mxu0 0
        %342 = vmatpush1.bf16.msra.mxu0 0
        %343 = vmatprep.subr.bf16.mxu0 0
        %344 = vmatpush1.bf16.msra.mxu0 0
        %345 = vmatprep.subr.bf16.mxu0 0
        %346 = vmatpush1.bf16.msra.mxu0 0
        %347 = vmatprep.subr.bf16.mxu0 0
        %348 = vmatpush1.bf16.msra.mxu0 0
        %349 = vmatprep.subr.bf16.mxu0 0
        %350 = vmatpush1.bf16.msra.mxu0 0
        %351 = vmatprep.subr.bf16.mxu0 0
        %352 = vmatpush1.bf16.msra.mxu0 0
        %353 = vmatprep.subr.bf16.mxu0 0
        %354 = vmatpush1.bf16.msra.mxu0 0
        %355 = vmatprep.subr.bf16.mxu0 0
        %356 = vmatpush1.bf16.msra.mxu0 0
        %357 = vmatprep.subr.bf16.mxu0 0
        %358 = vmatpush1.bf16.msra.mxu0 0
        %359 = vmatprep.mubr.bf16.mxu0 0
        %360 = vmatmul.mubr.bf16.gmra.mrb[0].mxu0 %v319
        %v361 = vpop.f32.mrb[0].mxu0
        %v362 = vadd.f32 0.0, %v361
        %v363 = vpop.f32.mrb[0].mxu0
        %v364 = vpop.f32.mrb[0].mxu0
        %v365 = vadd.f32 0.0, %v364
        %v366 = vpop.f32.mrb[0].mxu0
        %367 = vmatprep.mubr.bf16.mxu0 0
        %368 = vmatmul.mubr.bf16.gmra.mrb[0].mxu0 %v322
        %v369 = vpop.f32.mrb[0].mxu0
        %v370 = vadd.f32 0.0, %v369
        %v371 = vpop.f32.mrb[0].mxu0
        %v372 = vpop.f32.mrb[0].mxu0
        %v373 = vadd.f32 0.0, %v372
        %v374 = vpop.f32.mrb[0].mxu0
        %375 = vmatprep.mubr.bf16.mxu0 0
        %376 = vmatmul.mubr.bf16.gmra.mrb[0].mxu0 %v325
        %v377 = vpop.f32.mrb[0].mxu0
        %v378 = vadd.f32 0.0, %v377
        %v379 = vpop.f32.mrb[0].mxu0
        %v380 = vpop.f32.mrb[0].mxu0
        %v381 = vadd.f32 0.0, %v380
        %v382 = vpop.f32.mrb[0].mxu0
        %383 = vdwg.mxu0
        %v386 = vunpack.c.l.b16 %v259
        %v387 = vunpack.c.l.b16 %v260
        %v388 = vpack.c.b16 %v387, %v386
        %v390 = vsel %vm317, %v278, 0
        %v392 = vsel %vm317, %v279, 0
        %v394 = vsel %vm317, %v280, 0
        %396 = vmatprep.subr.bf16.mxu0 0
        %397 = vmatpush1.bf16.msra.mxu0 %v388
        %398 = vmatprep.subr.bf16.mxu0 0
        %399 = vmatpush1.bf16.msra.mxu0 0
        %400 = vmatprep.subr.bf16.mxu0 0
        %401 = vmatpush1.bf16.msra.mxu0 0
        %402 = vmatprep.subr.bf16.mxu0 0
        %403 = vmatpush1.bf16.msra.mxu0 0
        %404 = vmatprep.subr.bf16.mxu0 0
        %405 = vmatpush1.bf16.msra.mxu0 0
        %406 = vmatprep.subr.bf16.mxu0 0
        %407 = vmatpush1.bf16.msra.mxu0 0
        %408 = vmatprep.subr.bf16.mxu0 0
        %409 = vmatpush1.bf16.msra.mxu0 0
        %410 = vmatprep.subr.bf16.mxu0 0
        %411 = vmatpush1.bf16.msra.mxu0 0
        %412 = vmatprep.subr.bf16.mxu0 0
        %413 = vmatpush1.bf16.msra.mxu0 0
        %414 = vmatprep.subr.bf16.mxu0 0
        %415 = vmatpush1.bf16.msra.mxu0 0
        %416 = vmatprep.subr.bf16.mxu0 0
        %417 = vmatpush1.bf16.msra.mxu0 0
        %418 = vmatprep.subr.bf16.mxu0 0
        %419 = vmatpush1.bf16.msra.mxu0 0
        %420 = vmatprep.subr.bf16.mxu0 0
        %421 = vmatpush1.bf16.msra.mxu0 0
        %422 = vmatprep.subr.bf16.mxu0 0
        %423 = vmatpush1.bf16.msra.mxu0 0
        %424 = vmatprep.subr.bf16.mxu0 0
        %425 = vmatpush1.bf16.msra.mxu0 0
        %426 = vmatprep.subr.bf16.mxu0 0
        %427 = vmatpush1.bf16.msra.mxu0 0
        %428 = vmatprep.mubr.bf16.mxu0 0
        %429 = vmatmul.mubr.bf16.gmra.mrb[0].mxu0 %v390
        %v430 = vpop.f32.mrb[0].mxu0
        %v431 = vadd.f32 %v362, %v430
        %v432 = vpop.f32.mrb[0].mxu0
        %v433 = vpop.f32.mrb[0].mxu0
        %v434 = vadd.f32 %v365, %v433
        %v435 = vpop.f32.mrb[0].mxu0
        %436 = vmatprep.mubr.bf16.mxu0 0
        %437 = vmatmul.mubr.bf16.gmra.mrb[0].mxu0 %v392
        %v438 = vpop.f32.mrb[0].mxu0
        %v439 = vadd.f32 %v370, %v438
        %v440 = vpop.f32.mrb[0].mxu0
        %v441 = vpop.f32.mrb[0].mxu0
        %v442 = vadd.f32 %v373, %v441
        %v443 = vpop.f32.mrb[0].mxu0
        %444 = vmatprep.mubr.bf16.mxu0 0
        %445 = vmatmul.mubr.bf16.gmra.mrb[0].mxu0 %v394
        %v446 = vpop.f32.mrb[0].mxu0
        %v447 = vadd.f32 %v378, %v446
        %v448 = vpop.f32.mrb[0].mxu0
        %v449 = vpop.f32.mrb[0].mxu0
        %v450 = vadd.f32 %v381, %v449
        %v451 = vpop.f32.mrb[0].mxu0
        %452 = vdwg.mxu0
        %s453 = scalar_lea.vmem %s1, 16
        %v454 = vld [vmem:[%s453] sm:$0xf]
        %v455 = vld [vmem:[%s453 + $0x4] sm:$0xf]
        %v457 = vunpack.c.l.b16 %v258
        %v458 = vpack.c.b16 %v272, %v457
        %vm459 = vcmask 1046528
        %v460 = vrot.slane %v458, 1
        %v461 = vrot.slane %v279, 1
        %v462 = vsel %vm459, %v460, %v461
        %v463 = vrot.slane %v280, 1
        %v464 = vsel %vm459, %v461, %v463
        %v465 = vrot.slane %v281, 1
        %v466 = vsel %vm459, %v463, %v465
        %v469 = vunpack.c.l.b16 %v454
        %v470 = vunpack.c.l.b16 %v455
        %v471 = vpack.c.b16 %v470, %v469
        %v474 = vsel %vm317, %v462, 0
        %v477 = vsel %vm317, %v464, 0
        %v480 = vsel %vm317, %v466, 0
        %482 = vmatprep.subr.bf16.mxu0 0
        %483 = vmatpush1.bf16.msra.mxu0 %v471
        %484 = vmatprep.subr.bf16.mxu0 0
        %485 = vmatpush1.bf16.msra.mxu0 0
        %486 = vmatprep.subr.bf16.mxu0 0
        %487 = vmatpush1.bf16.msra.mxu0 0
        %488 = vmatprep.subr.bf16.mxu0 0
        %489 = vmatpush1.bf16.msra.mxu0 0
        %490 = vmatprep.subr.bf16.mxu0 0
        %491 = vmatpush1.bf16.msra.mxu0 0
        %492 = vmatprep.subr.bf16.mxu0 0
        %493 = vmatpush1.bf16.msra.mxu0 0
        %494 = vmatprep.subr.bf16.mxu0 0
        %495 = vmatpush1.bf16.msra.mxu0 0
        %496 = vmatprep.subr.bf16.mxu0 0
        %497 = vmatpush1.bf16.msra.mxu0 0
        %498 = vmatprep.subr.bf16.mxu0 0
        %499 = vmatpush1.bf16.msra.mxu0 0
        %500 = vmatprep.subr.bf16.mxu0 0
        %501 = vmatpush1.bf16.msra.mxu0 0
        %502 = vmatprep.subr.bf16.mxu0 0
        %503 = vmatpush1.bf16.msra.mxu0 0
        %504 = vmatprep.subr.bf16.mxu0 0
        %505 = vmatpush1.bf16.msra.mxu0 0
        %506 = vmatprep.subr.bf16.mxu0 0
        %507 = vmatpush1.bf16.msra.mxu0 0
        %508 = vmatprep.subr.bf16.mxu0 0
        %509 = vmatpush1.bf16.msra.mxu0 0
        %510 = vmatprep.subr.bf16.mxu0 0
        %511 = vmatpush1.bf16.msra.mxu0 0
        %512 = vmatprep.subr.bf16.mxu0 0
        %513 = vmatpush1.bf16.msra.mxu0 0
        %514 = vmatprep.mubr.bf16.mxu0 0
        %515 = vmatmul.mubr.bf16.gmra.mrb[0].mxu0 %v474
        %v516 = vpop.f32.mrb[0].mxu0
        %v517 = vadd.f32 0.0, %v516
        %v518 = vpop.f32.mrb[0].mxu0
        %v519 = vpop.f32.mrb[0].mxu0
        %v520 = vadd.f32 0.0, %v519
        %v521 = vpop.f32.mrb[0].mxu0
        %522 = vmatprep.mubr.bf16.mxu0 0
        %523 = vmatmul.mubr.bf16.gmra.mrb[0].mxu0 %v477
        %v524 = vpop.f32.mrb[0].mxu0
        %v525 = vadd.f32 0.0, %v524
        %v526 = vpop.f32.mrb[0].mxu0
        %v527 = vpop.f32.mrb[0].mxu0
        %v528 = vadd.f32 0.0, %v527
        %v529 = vpop.f32.mrb[0].mxu0
        %530 = vmatprep.mubr.bf16.mxu0 0
        %531 = vmatmul.mubr.bf16.gmra.mrb[0].mxu0 %v480
        %v532 = vpop.f32.mrb[0].mxu0
        %v533 = vadd.f32 0.0, %v532
        %v534 = vpop.f32.mrb[0].mxu0
        %v535 = vpop.f32.mrb[0].mxu0
        %v536 = vadd.f32 0.0, %v535
        %v537 = vpop.f32.mrb[0].mxu0
        %538 = vdwg.mxu0
        %v539 = vadd.f32 %v431, %v517
        %v540 = vadd.f32 %v434, %v520
        %v541 = vadd.f32 %v439, %v525
        %v542 = vadd.f32 %v442, %v528
        %v543 = vadd.f32 %v447, %v533
        %v544 = vadd.f32 %v450, %v536
        %v545 = vld [vmem:[%s3] sm:$0x1]
        %v546 = vlaneseq
        %v547 = vshrl.u32 %v546, 7
        %v548 = vsub.s32 0, %v547
        %v549 = vrot.slane %v545, %v548
        %v550 = vadd.f32 %v539, %v549
        %v551 = vadd.f32 %v540, %v549
        %v552 = vadd.f32 %v541, %v549
        %v553 = vadd.f32 %v542, %v549
        %v554 = vadd.f32 %v543, %v549
        %v555 = vadd.f32 %v544, %v549
        %v556 = vmax.f32 %v550, 0.0
        %v557 = vmax.f32 %v551, 0.0
        %v558 = vmax.f32 %v552, 0.0
        %v559 = vmax.f32 %v553, 0.0
        %v560 = vmax.f32 %v554, 0.0
        %v561 = vmax.f32 %v555, 0.0
        %v562 = vld [vmem:[%s2] sm:$0xf]
        %v563 = vld [vmem:[%s2 + $0x4] sm:$0xf]
        %v564 = vld [vmem:[%s3 + $0x1] sm:$0x1]
        %v565 = vlaneseq
        %v566 = vshrl.u32 %v565, 7
        %v567 = vsub.s32 0, %v566
        %v568 = vrot.slane %v564, %v567
        %v571 = vunpack.c.l.b16 %v562
        %v572 = vunpack.c.l.b16 %v563
        %v573 = vpack.c.b16 %v572, %v571
        %575 = vmatprep.subr.bf16.mxu0 0
        %576 = vmatpush1.bf16.msra.mxu0 %v573
        %577 = vmatprep.subr.bf16.mxu0 0
        %578 = vmatpush1.bf16.msra.mxu0 0
        %579 = vmatprep.subr.bf16.mxu0 0
        %580 = vmatpush1.bf16.msra.mxu0 0
        %581 = vmatprep.subr.bf16.mxu0 0
        %582 = vmatpush1.bf16.msra.mxu0 0
        %583 = vmatprep.subr.bf16.mxu0 0
        %584 = vmatpush1.bf16.msra.mxu0 0
        %585 = vmatprep.subr.bf16.mxu0 0
        %586 = vmatpush1.bf16.msra.mxu0 0
        %587 = vmatprep.subr.bf16.mxu0 0
        %588 = vmatpush1.bf16.msra.mxu0 0
        %589 = vmatprep.subr.bf16.mxu0 0
        %590 = vmatpush1.bf16.msra.mxu0 0
        %591 = vmatprep.subr.bf16.mxu0 0
        %592 = vmatpush1.bf16.msra.mxu0 0
        %593 = vmatprep.subr.bf16.mxu0 0
        %594 = vmatpush1.bf16.msra.mxu0 0
        %595 = vmatprep.subr.bf16.mxu0 0
        %596 = vmatpush1.bf16.msra.mxu0 0
        %597 = vmatprep.subr.bf16.mxu0 0
        %598 = vmatpush1.bf16.msra.mxu0 0
        %599 = vmatprep.subr.bf16.mxu0 0
        %600 = vmatpush1.bf16.msra.mxu0 0
        %601 = vmatprep.subr.bf16.mxu0 0
        %602 = vmatpush1.bf16.msra.mxu0 0
        %603 = vmatprep.subr.bf16.mxu0 0
        %604 = vmatpush1.bf16.msra.mxu0 0
        %605 = vmatprep.subr.bf16.mxu0 0
        %606 = vmatpush1.bf16.msra.mxu0 0
        %607 = vmatprep.mubr.bf16.mxu0 0
        %608 = vmatmul.mubr.bf16.gmra.mrb[0].mxu0 %v319
        %v609 = vpop.f32.mrb[0].mxu0
        %v610 = vadd.f32 %v568, %v609
        %v611 = vpop.f32.mrb[0].mxu0
        %v612 = vpop.f32.mrb[0].mxu0
        %v613 = vadd.f32 %v568, %v612
        %v614 = vpop.f32.mrb[0].mxu0
        %615 = vmatprep.mubr.bf16.mxu0 0
        %616 = vmatmul.mubr.bf16.gmra.mrb[0].mxu0 %v322
        %v617 = vpop.f32.mrb[0].mxu0
        %v618 = vadd.f32 %v568, %v617
        %v619 = vpop.f32.mrb[0].mxu0
        %v620 = vpop.f32.mrb[0].mxu0
        %v621 = vadd.f32 %v568, %v620
        %v622 = vpop.f32.mrb[0].mxu0
        %623 = vmatprep.mubr.bf16.mxu0 0
        %624 = vmatmul.mubr.bf16.gmra.mrb[0].mxu0 %v325
        %v625 = vpop.f32.mrb[0].mxu0
        %v626 = vadd.f32 %v568, %v625
        %v627 = vpop.f32.mrb[0].mxu0
        %v628 = vpop.f32.mrb[0].mxu0
        %v629 = vadd.f32 %v568, %v628
        %v630 = vpop.f32.mrb[0].mxu0
        %631 = vdwg.mxu0
        %vm632 = vcmask 261120
        %v633 = vsel %vm632, %v556, 0.0
        %v634 = vsel %vm632, %v557, 0.0
        %v635 = vadd.f32 %v633, %v634
        %v636 = vsel %vm632, %v558, 0.0
        %v637 = vadd.f32 %v635, %v636
        %v638 = vsel %vm632, %v559, 0.0
        %v639 = vadd.f32 %v637, %v638
        %v640 = vsel %vm632, %v560, 0.0
        %v641 = vadd.f32 %v639, %v640
        %v642 = vsel %vm632, %v561, 0.0
        %v643 = vadd.f32 %v641, %v642
        %v644 = vrot.slane %v643, 4
        %v645 = vadd.f32 %v643, %v644
        %v646 = vrot.slane %v645, 2
        %v647 = vadd.f32 %v645, %v646
        %v648 = vrot.slane %v647, 1
        %v649 = vadd.f32 %v647, %v648
        %v650 = vrcp.pop 48.0
        %v651 = vmul.f32 %v649, %v650
        %v652 = vpack.c.bf16 %v651, %v651
        %v653 = vld [vmem:[%s4] sm:$0xf]
        %v654 = vld [vmem:[%s4 + $0x4] sm:$0xf]
        %v655 = vld [vmem:[%s4 + $0x8] sm:$0xf]
        %v656 = vld [vmem:[%s4 + $0xc] sm:$0xf]
        %v661 = vunpack.c.l.b16 %v653
        %v662 = vunpack.c.l.b16 %v654
        %v663 = vunpack.c.l.b16 %v655
        %v664 = vunpack.c.l.b16 %v656
        %v665 = vpack.c.b16 %v662, %v661
        %v666 = vpack.c.b16 %v664, %v663
        %v670 = vsel %vm632, %v652, 0
        %672 = vmatprep.subr.bf16.mxu0 0
        %673 = vmatpush1.bf16.msra.mxu0 %v665
        %674 = vmatprep.subr.bf16.mxu0 0
        %675 = vmatpush1.bf16.msra.mxu0 %v666
        %676 = vmatprep.subr.bf16.mxu0 0
        %677 = vmatpush1.bf16.msra.mxu0 0
        %678 = vmatprep.subr.bf16.mxu0 0
        %679 = vmatpush1.bf16.msra.mxu0 0
        %680 = vmatprep.subr.bf16.mxu0 0
        %681 = vmatpush1.bf16.msra.mxu0 0
        %682 = vmatprep.subr.bf16.mxu0 0
        %683 = vmatpush1.bf16.msra.mxu0 0
        %684 = vmatprep.subr.bf16.mxu0 0
        %685 = vmatpush1.bf16.msra.mxu0 0
        %686 = vmatprep.subr.bf16.mxu0 0
        %687 = vmatpush1.bf16.msra.mxu0 0
        %688 = vmatprep.subr.bf16.mxu0 0
        %689 = vmatpush1.bf16.msra.mxu0 0
        %690 = vmatprep.subr.bf16.mxu0 0
        %691 = vmatpush1.bf16.msra.mxu0 0
        %692 = vmatprep.subr.bf16.mxu0 0
        %693 = vmatpush1.bf16.msra.mxu0 0
        %694 = vmatprep.subr.bf16.mxu0 0
        %695 = vmatpush1.bf16.msra.mxu0 0
        %696 = vmatprep.subr.bf16.mxu0 0
        %697 = vmatpush1.bf16.msra.mxu0 0
        %698 = vmatprep.subr.bf16.mxu0 0
        %699 = vmatpush1.bf16.msra.mxu0 0
        %700 = vmatprep.subr.bf16.mxu0 0
        %701 = vmatpush1.bf16.msra.mxu0 0
        %702 = vmatprep.subr.bf16.mxu0 0
        %703 = vmatpush1.bf16.msra.mxu0 0
        %704 = vmatprep.mubr.bf16.mxu0 0
        %705 = vmatmul.mubr.bf16.gmra.mrb[0].mxu0 %v670
        %v706 = vpop.f32.mrb[0].mxu0
        %v707 = vadd.f32 0.0, %v706
        %v708 = vpop.f32.mrb[0].mxu0
        %v709 = vpop.f32.mrb[0].mxu0
        %v710 = vpop.f32.mrb[0].mxu0
        %711 = vdwg.mxu0
        %v712 = vmax.f32 %v707, 0.0
        %v713 = vpack.c.bf16 %v712, %v712
        %v714 = vld [vmem:[%s5] sm:$0x1]
        %vm715 = vcmask 15360
        %v717 = vsel %vm715, %v713, 0
        %vm719 = vcmask 1040384
        %v721 = vsel %vm719, %v714, 0
        %723 = vmatprep.subr.bf16.mxu0 0
        %724 = vmatpush1.bf16.msra.mxu0 %v721
        %725 = vmatprep.subr.bf16.mxu0 0
        %726 = vmatpush1.bf16.msra.mxu0 0
        %727 = vmatprep.subr.bf16.mxu0 0
        %728 = vmatpush1.bf16.msra.mxu0 0
        %729 = vmatprep.subr.bf16.mxu0 0
        %730 = vmatpush1.bf16.msra.mxu0 0
        %731 = vmatprep.subr.bf16.mxu0 0
        %732 = vmatpush1.bf16.msra.mxu0 0
        %733 = vmatprep.subr.bf16.mxu0 0
        %734 = vmatpush1.bf16.msra.mxu0 0
        %735 = vmatprep.subr.bf16.mxu0 0
        %736 = vmatpush1.bf16.msra.mxu0 0
        %737 = vmatprep.subr.bf16.mxu0 0
        %738 = vmatpush1.bf16.msra.mxu0 0
        %739 = vmatprep.subr.bf16.mxu0 0
        %740 = vmatpush1.bf16.msra.mxu0 0
        %741 = vmatprep.subr.bf16.mxu0 0
        %742 = vmatpush1.bf16.msra.mxu0 0
        %743 = vmatprep.subr.bf16.mxu0 0
        %744 = vmatpush1.bf16.msra.mxu0 0
        %745 = vmatprep.subr.bf16.mxu0 0
        %746 = vmatpush1.bf16.msra.mxu0 0
        %747 = vmatprep.subr.bf16.mxu0 0
        %748 = vmatpush1.bf16.msra.mxu0 0
        %749 = vmatprep.subr.bf16.mxu0 0
        %750 = vmatpush1.bf16.msra.mxu0 0
        %751 = vmatprep.subr.bf16.mxu0 0
        %752 = vmatpush1.bf16.msra.mxu0 0
        %753 = vmatprep.subr.bf16.mxu0 0
        %754 = vmatpush1.bf16.msra.mxu0 0
        %755 = vmatprep.mubr.bf16.mxu0 0
        %756 = vmatmul.mubr.bf16.gmra.mrb[0].mxu0 %v717
        %v757 = vpop.f32.mrb[0].mxu0
        %v758 = vadd.f32 0.0, %v757
        %v759 = vpop.f32.mrb[0].mxu0
        %v760 = vpop.f32.mrb[0].mxu0
        %v761 = vpop.f32.mrb[0].mxu0
        %762 = vdwg.mxu0
        %v763 = vxor.u32 %v758, 2147483648
        %v764 = vmul.f32 %v763, 1.442695
        %v765 = vpow.pop %v764
        %v766 = vadd.f32 %v765, 1.0
        %v767 = vrcp.pop %v766
        %v768 = vmul.f32 1.0, %v767
        %v769 = vlaneseq
        %v770 = vshrl.u32 %v769, 7
        %v771 = vsub.s32 0, %v770
        %v772 = vrot.slane %v768, %v771
        %v773 = vmul.f32 %v556, %v772
        %v774 = vmul.f32 %v557, %v772
        %v775 = vmul.f32 %v558, %v772
        %v776 = vmul.f32 %v559, %v772
        %v777 = vmul.f32 %v560, %v772
        %v778 = vmul.f32 %v561, %v772
        %v779 = vadd.f32 %v773, %v610
        %v780 = vadd.f32 %v774, %v613
        %v781 = vadd.f32 %v775, %v618
        %v782 = vadd.f32 %v776, %v621
        %v783 = vadd.f32 %v777, %v626
        %v784 = vadd.f32 %v778, %v629
        %v785 = vmax.f32 %v779, 0.0
        %v786 = vmax.f32 %v780, 0.0
        %v787 = vmax.f32 %v781, 0.0
        %v788 = vmax.f32 %v782, 0.0
        %v789 = vmax.f32 %v783, 0.0
        %v790 = vmax.f32 %v784, 0.0
        %791 = vst.msk [vmem:[#allocation2] sm:$0xff] %vm632, %v785
        %792 = vst.msk [vmem:[#allocation2 + $0x8] sm:$0xff] %vm632, %v786
        %793 = vst.msk [vmem:[#allocation2 + $0x10] sm:$0xff] %vm632, %v787
        %794 = vst.msk [vmem:[#allocation2 + $0x18] sm:$0xff] %vm632, %v788
        %795 = vst.msk [vmem:[#allocation2 + $0x20] sm:$0xff] %vm632, %v789
        %796 = vst.msk [vmem:[#allocation2 + $0x28] sm:$0xff] %vm632, %v790
        %v797 = vld [vmem:[#allocation2] ss:$3 sm:$0xff]
        %s798 = scalar_lea.vmem [#allocation2], 24
        %v799 = vld [vmem:[%s798] ss:$3 sm:$0xff]
        %s800 = scalar_lea.vmem [#allocation2], 1
        %v801 = vld [vmem:[%s800] ss:$3 sm:$0xff]
        %s802 = scalar_lea.vmem [#allocation2], 25
        %v803 = vld [vmem:[%s802] ss:$3 sm:$0xff]
        %v804 = vmax.f32 %v797, %v801
        %v805 = vmax.f32 %v799, %v803
        %s806 = scalar_lea.vmem [#allocation2], 2
        %v807 = vld [vmem:[%s806] ss:$3 sm:$0xff]
        %s808 = scalar_lea.vmem [#allocation2], 26
        %v809 = vld [vmem:[%s808] ss:$3 sm:$0xff]
        %v810 = vmax.f32 %v804, %v807
        %v811 = vmax.f32 %v805, %v809
        %812 = vst.msk [vmem:[%s244] sm:$0xff] %vm632, %v810
        %813 = vst.msk [vmem:[%s244 + $0x8] sm:$0xff] %vm632, %v811
        %s814 = sand.u32 %s159, 1
        %s815 = scalar_lea.sflag [#allocation4], %s814
        %s816 = sand.u32 %s159, 1
        %s817 = smul.addr %s816, 16
        %s818 = scalar_lea.vmem [#allocation3], %s817
        // Predicated region
        $region45: #{basic_block_forward.1} parent=43 // pred_check
          %p819 = pneg %p169
        $region46: #{basic_block_forward.1} parent=43 // pred_check_branch
          %821 = sbr.rel (%p819) target = $region48
        $region47: #{basic_block_forward.1} parent=43 // pred_region
          %s823 = ssub.s32 256, 256
          %824 = vsyncadd %s815, %s823
          %s825 = smul.addr %s20, 2
          %s826 = smul.addr %s825, 128
          %s827 = scalar_lea.hbm %s6, %s826
          %s828 = sshll.u32 %s818, 4
          %s829 = int_to_ptr.vmem [resolvable:$true] %s828
          %834 = dma.vmem_to_hbm [thread:$0]  %s829, 256, %s827, %s815, 128, 128, 8
        $region48: #{basic_block_forward.1} parent=43 // pred_fallthru
          _
      $region44: #{basic_block_forward.1} parent=5 // pred_fallthru
        _
      %p835 = scmp.le.s32.totalorder 2, %s15
      // Predicated region
      $region49: #{basic_block_forward.1} parent=5 // pred_check
        %p836 = pneg %p835
      $region50: #{basic_block_forward.1} parent=5 // pred_check_branch
        %838 = sbr.rel (%p836) target = $region52
      $region51: #{basic_block_forward.1} parent=5 // pred_region
        %s839 = ssub.s32 %s15, 2
        // Predicated region
        $region53: #{basic_block_forward.1} parent=51 // pred_check
          %p840 = pneg %p175
        $region54: #{basic_block_forward.1} parent=51 // pred_check_branch
          %842 = sbr.rel (%p840) target = $region56
        $region55: #{basic_block_forward.1} parent=51 // pred_region
          %s843 = sand.u32 %s160, 1
          %s844 = scalar_lea.sflag [#allocation4], %s843
          %s845 = sand.u32 %s160, 1
          %s846 = smul.addr %s845, 16
          %s847 = scalar_lea.vmem [#allocation3], %s846
          %848 = dma.done %s844, 256
        $region56: #{basic_block_forward.1} parent=51 // pred_fallthru
          _
      $region52: #{basic_block_forward.1} parent=5 // pred_fallthru
        _
    $region6: #{basic_block_forward.1} parent=1 // loop_footer
      %s19 = sadd.s32 1, %s15
    $region7: #{basic_block_forward.1} parent=1 // loop_footer_branch
      %14 = sbr.rel target = $region3
    $region8: #{basic_block_forward.1} parent=1 // loop_exit
      _
    %849 = vsyncpa [#allocation4], 1
    %s850 = scalar_lea.sflag [#allocation4], 1
    %851 = vsyncpa %s850, 1

</llo_original>
